<compile_context>
chip_gen: v5e
topology: v5e:2x2
jax: 0.10.0
libtpu: 0.0.40
codegen_flags: <defaults>
</compile_context>

<pallas_src>
import functools

import jax
import jax.numpy as jnp
from jax import lax
from jax.experimental import pallas as pl
from jax.experimental.pallas import tpu as pltpu

_VMEM_LIMIT = 48 * 1024 * 1024  # fits v7x (64 MiB phys) and leaves headroom on v5e/v6e


# -----------------------------------------------------------------------------
# Pass 1: uncentered matmul  Y = x @ W.T  (f32 accumulation on the MXU).
# -----------------------------------------------------------------------------
def _matmul_kernel(x_ref, w_ref, y_ref, acc_ref):
    k = pl.program_id(2)

    @pl.when(k == 0)
    def _init():
        acc_ref[...] = jnp.zeros_like(acc_ref)

    # x: (tile_b, tile_k), w: (tile_out, tile_k); contract over K (dim 1 of both).
    # Mosaic handles the transposed-RHS operand natively, so no per-step W transpose
    # is materialized in VMEM.
    acc_ref[...] += lax.dot_general(
        x_ref[...], w_ref[...],
        dimension_numbers=(((1,), (1,)), ((), ())),
        preferred_element_type=jnp.float32,
    )

    @pl.when(k == pl.num_programs(2) - 1)
    def _finalize():
        y_ref[...] = acc_ref[...]


# -----------------------------------------------------------------------------
# Pass 2: row-centering epilogue.
#   out = Y - rowmean(Y)  ==  x @ (W - mean_over_out(W)).T
# -----------------------------------------------------------------------------
def _center_rows_kernel(y_ref, o_ref, *, inv_out):
    y = y_ref[...]                                         # (tile_rows, Out), f32
    corr = jnp.sum(y, axis=1, keepdims=True) * inv_out     # (tile_rows, 1)
    o_ref[...] = (y - corr).astype(o_ref.dtype)


def _pick_tile(dim, cap, align):
    """Largest multiple of `align` that divides `dim`, capped at `cap`.

    Falls back to the full dim (always a legal block shape)."""
    cap = min(cap, dim)
    t = cap - cap % align
    while t >= align:
        if dim % t == 0:
            return t
        t -= align
    return dim


def zero_mean_linear(x, weight, *, tile_b=None, tile_out=None, tile_k=None):
    """x: (B, In), weight: (Out, In) -> (B, Out) = x @ (weight - weight.mean(0)).T."""
    B, In = x.shape
    Out, In_w = weight.shape
    assert In == In_w, "in_features mismatch"

    itemsize = jnp.dtype(x.dtype).itemsize
    sublane = {4: 8, 2: 16, 1: 32}.get(itemsize, 8)

    # Generation-safe defaults: big enough to amortize per-grid-step overhead on
    # v5e/v6e, small enough to fit the v7x VMEM budget, and >= 2 Out tiles when
    # Out > 512 so v7x megacore sharding has parallel work.
    tile_b = _pick_tile(B, 256, sublane) if tile_b is None else tile_b
    tile_out = _pick_tile(Out, 512, 128) if tile_out is None else tile_out
    tile_k = _pick_tile(In, 1024, 128) if tile_k is None else tile_k

    assert B % tile_b == 0 and Out % tile_out == 0 and In % tile_k == 0, (
        "tile sizes must evenly divide (B, Out, In)")
    assert tile_b % sublane == 0 or tile_b == B
    assert tile_out % 128 == 0 or tile_out == Out
    assert tile_k % 128 == 0 or tile_k == In

    grid = (B // tile_b, Out // tile_out, In // tile_k)

    # ---- Pass 1: Y = x @ W.T, f32 intermediate. W is read from HBM exactly once
    # per batch tile (B//tile_b passes total; x, the smaller operand at small batch,
    # is the one re-streamed across Out tiles).
    y = pl.pallas_call(
        _matmul_kernel,
        out_shape=jax.ShapeDtypeStruct((B, Out), jnp.float32),
        grid_spec=pltpu.PrefetchScalarGridSpec(
            num_scalar_prefetch=0,
            grid=grid,
            in_specs=[
                pl.BlockSpec((tile_b, tile_k), lambda i, j, k: (i, k)),      # x
                pl.BlockSpec((tile_out, tile_k), lambda i, j, k: (j, k)),    # W
            ],
            out_specs=pl.BlockSpec((tile_b, tile_out), lambda i, j, k: (i, j)),
            scratch_shapes=[pltpu.VMEM((tile_b, tile_out), jnp.float32)],
        ),
        compiler_params=pltpu.CompilerParams(
            dimension_semantics=("parallel", "parallel", "arbitrary"),
            vmem_limit_bytes=_VMEM_LIMIT,
        ),
    )(x, weight)

    # ---- Pass 2: subtract the per-row mean of Y (tiny: one pass over (B, Out)).
    # Row blocks span the full Out dim (needed for the row mean); cap the row-tile so
    # double-buffered in (f32) + out blocks stay well inside scoped VMEM even for
    # large Out.
    bytes_per_row = Out * (2 * 4 + 2 * itemsize)
    row_cap = max(sublane, (32 * 1024 * 1024) // max(bytes_per_row, 1))
    tile_rows = _pick_tile(B, min(256, row_cap), sublane)

    out = pl.pallas_call(
        functools.partial(_center_rows_kernel, inv_out=1.0 / Out),
        out_shape=jax.ShapeDtypeStruct((B, Out), x.dtype),
        grid_spec=pltpu.PrefetchScalarGridSpec(
            num_scalar_prefetch=0,
            grid=(B // tile_rows,),
            in_specs=[pl.BlockSpec((tile_rows, Out), lambda i: (i, 0))],
            out_specs=pl.BlockSpec((tile_rows, Out), lambda i: (i, 0)),
        ),
        compiler_params=pltpu.CompilerParams(
            dimension_semantics=("parallel",),
            vmem_limit_bytes=_VMEM_LIMIT,
        ),
    )(y)

    return out


if __name__ == "__main__":
    import math

    B, In, Out = 16, 256, 1024

    key = jax.random.PRNGKey(0)
    kx, kw = jax.random.split(key, 2)

    x = jax.random.normal(kx, (B, In), dtype=jnp.float32)
    # nn.init.kaiming_uniform_(w, a=sqrt(5)) on (out, in): bound = 1/sqrt(fan_in)
    bound = 1.0 / math.sqrt(In)
    weight = jax.random.uniform(kw, (Out, In), dtype=jnp.float32,
                                minval=-bound, maxval=bound)

    # pure-JAX reference of the module's forward
    w_centered = weight - jnp.mean(weight, axis=0, keepdims=True)
    ref = x @ w_centered.T

    # default (generation-aware) tiling
    out = zero_mean_linear(x, weight)
    jax.block_until_ready(out)
    assert jnp.allclose(out, ref, atol=2e-4, rtol=2e-4), "mismatch (default tiles)"

    # explicit small tiles: exercises multi-tile B / Out / K accumulation paths
    out2 = zero_mean_linear(x, weight, tile_b=8, tile_out=256, tile_k=128)
    jax.block_until_ready(out2)
    assert jnp.allclose(out2, ref, atol=2e-4, rtol=2e-4), "mismatch (explicit tiles)"

    print("KERNEL_OK")
</pallas_src>

<mosaic_0001>
module attributes {stable_mosaic.version = 11 : i64} {
  func.func @_matmul_kernel(%arg0: i32, %arg1: i32, %arg2: i32, %arg3: memref<16x256xf32, #tpu.memory_space<vmem>>, %arg4: memref<512x256xf32, #tpu.memory_space<vmem>>, %arg5: memref<16x512xf32, #tpu.memory_space<vmem>>, %arg6: memref<16x512xf32, #tpu.memory_space<vmem>>) attributes {dimension_semantics = [#tpu.dimension_semantics<parallel>, #tpu.dimension_semantics<parallel>, #tpu.dimension_semantics<arbitrary>], iteration_bounds = array<i64: 1, 2, 1>, scalar_prefetch = 0 : i64, scratch_operands = 1 : i64, tpu.core_type = #tpu.core_type<tc>, window_params = [{transform_indices = @transform_0, window_bounds = array<i64: 16, 256>}, {transform_indices = @transform_1, window_bounds = array<i64: 512, 256>}, {transform_indices = @transform_2, window_bounds = array<i64: 16, 512>}]} {
    %c0_i32 = arith.constant 0 : i32
    %0 = arith.cmpi eq, %arg2, %c0_i32 : i32
    %1 = arith.extui %0 : i1 to i32
    %c0_i32_0 = arith.constant 0 : i32
    %2 = arith.cmpi ne, %1, %c0_i32_0 : i32
    scf.if %2 {
      %cst_10 = arith.constant 0.000000e+00 : f32
      %12 = vector.broadcast %cst_10 : f32 to vector<16x512xf32>
      %c0_11 = arith.constant 0 : index
      %c0_12 = arith.constant 0 : index
      %13 = vector.load %arg6[%c0_11, %c0_12] : memref<16x512xf32, #tpu.memory_space<vmem>>, vector<16x512xf32>
      tpu.vector_store %arg6[%c0_11, %c0_12], %12 {strides = array<i32>} : memref<16x512xf32, #tpu.memory_space<vmem>>, vector<16x512xf32>,
    } else {
    }
    %c0 = arith.constant 0 : index
    %c0_1 = arith.constant 0 : index
    %3 = vector.load %arg6[%c0, %c0_1] : memref<16x512xf32, #tpu.memory_space<vmem>>, vector<16x512xf32>
    %c0_2 = arith.constant 0 : index
    %c0_3 = arith.constant 0 : index
    %4 = vector.load %arg3[%c0_2, %c0_3] : memref<16x256xf32, #tpu.memory_space<vmem>>, vector<16x256xf32>
    %c0_4 = arith.constant 0 : index
    %c0_5 = arith.constant 0 : index
    %5 = vector.load %arg4[%c0_4, %c0_5] : memref<512x256xf32, #tpu.memory_space<vmem>>, vector<512x256xf32>
    %cst = arith.constant dense<0.000000e+00> : vector<16x512xf32>
    %6 = tpu.matmul %4, %5, %cst {dimension_numbers = #tpu.dot_dimension_numbers<[1], [1], [0], [0], [0, 0, 1, 0], [], []>} : vector<16x256xf32>, vector<512x256xf32>, vector<16x512xf32> -> vector<16x512xf32>
    %7 = arith.addf %3, %6 : vector<16x512xf32>
    %c0_6 = arith.constant 0 : index
    %c0_7 = arith.constant 0 : index
    %8 = vector.load %arg6[%c0_6, %c0_7] : memref<16x512xf32, #tpu.memory_space<vmem>>, vector<16x512xf32>
    tpu.vector_store %arg6[%c0_6, %c0_7], %7 {strides = array<i32>} : memref<16x512xf32, #tpu.memory_space<vmem>>, vector<16x512xf32>,
    %c0_i32_8 = arith.constant 0 : i32
    %9 = arith.cmpi eq, %arg2, %c0_i32_8 : i32
    %10 = arith.extui %9 : i1 to i32
    %c0_i32_9 = arith.constant 0 : i32
    %11 = arith.cmpi ne, %10, %c0_i32_9 : i32
    scf.if %11 {
      %c0_10 = arith.constant 0 : index
      %c0_11 = arith.constant 0 : index
      %12 = vector.load %arg6[%c0_10, %c0_11] : memref<16x512xf32, #tpu.memory_space<vmem>>, vector<16x512xf32>
      %c0_12 = arith.constant 0 : index
      %c0_13 = arith.constant 0 : index
      %13 = vector.load %arg5[%c0_12, %c0_13] : memref<16x512xf32, #tpu.memory_space<vmem>>, vector<16x512xf32>
      tpu.vector_store %arg5[%c0_12, %c0_13], %12 {strides = array<i32>} : memref<16x512xf32, #tpu.memory_space<vmem>>, vector<16x512xf32>,
    } else {
    }
    return
  }
  func.func @transform_0(%arg0: i32, %arg1: i32, %arg2: i32) -> (i32, i32) {
    %c0_i32 = arith.constant 0 : i32
    return %arg0, %arg2 : i32, i32
  }
  func.func @transform_1(%arg0: i32, %arg1: i32, %arg2: i32) -> (i32, i32) {
    %c0_i32 = arith.constant 0 : i32
    return %arg1, %arg2 : i32, i32
  }
  func.func @transform_2(%arg0: i32, %arg1: i32, %arg2: i32) -> (i32, i32) {
    %c0_i32 = arith.constant 0 : i32
    return %arg0, %arg1 : i32, i32
  }
}

</mosaic_0001>

<llo_original>
// kernel: tpu_custom_call.1
$region0: #{tpu_custom_call.1}
  #allocation0 [shape = 'u32[]', space=smem, size = 0x4, offset = 0x4, fixed_abs, tag = 'smem constant byte address 0x4 - core index']
  #allocation1 [shape = 'u32[72,128]{1,0:T(1,128)}', space=vmem, size = 0x9000, scoped, tag = 'internal scratch']
  #allocation2 [shape = 'f32[16,512]{1,0:T(8,128)}', space=vmem, size = 0x8000, scoped, tag = 'scratch operand']
  %s0 = inlined_call_operand.hbm [shape: f32[16,256], index: 0, kind: input, shape index: {}]
  %s1 = inlined_call_operand.hbm [shape: f32[1024,256], index: 1, kind: input, shape index: {}]
  %s2 = inlined_call_operand.hbm [shape: f32[16,1024], index: 2, kind: output, shape index: {}]
  %s3 = sld [smem:[#allocation0]]
  $region57: #{tpu_custom_call.1} parent=0
    _
  %s5 = ssub.s32 1, %s3
  %s6 = scalar_select 0, %s5, %s3
  $region1: #{tpu_custom_call.1} parent=0
    #allocation3 [shape = 'u8[16384]{0}', space=vmem, size = 0x4000, scoped, tag = 'input window, operand 0, single buffered']
    #allocation4 [shape = 's32[2]{0}', space=sflag, size = 0x8, scoped, tag = 'scoped memory for tpu_custom_call.1']
    #allocation5 [shape = 's32[2]{0}', space=sflag, size = 0x8, scoped, tag = 'scoped memory for tpu_custom_call.1']
    #allocation6 [shape = 'u8[1048576]{0}', space=vmem, size = 0x100000, scoped, tag = 'input window, operand 1']
    #allocation7 [shape = 's32[2]{0}', space=sflag, size = 0x8, scoped, tag = 'scoped memory for tpu_custom_call.1']
    #allocation8 [shape = 'u8[65536]{0}', space=vmem, size = 0x10000, scoped, tag = 'output window, operand 0']
    %7 = vsyncpa [#allocation4], 0
    %8 = vsyncpa [#allocation7], 0
    %s9 = scalar_lea.sflag [#allocation7], 1
    %10 = vsyncpa %s9, 0
    %11 = vsyncpa [#allocation5], 0
    %s12 = scalar_lea.sflag [#allocation5], 1
    %13 = vsyncpa %s12, 0
    loop: start=0, step=1, limit=4
    $region2: #{tpu_custom_call.1} parent=1 // loop_pre_header
      _
    $region3: #{tpu_custom_call.1} parent=1 // loop_header
      %s15 = sphi 0, %s19
      %p16 = scmp.ge.s32.totalorder %s15, 4
      %s22 = sphi 0, %s41
      %s23 = sphi 0, %s37
      %s24 = sphi 0, %s33
      %s25 = sphi 0, %s22
      %s26 = sphi 0, %s23
      %s27 = sphi 0, %s24
      %s28 = sphi 0, %s25
      %s29 = sphi 0, %s26
      %s30 = sphi 0, %s27
      %s46 = sphi 0, %s48
      %s49 = sphi 0, %s46
      %s50 = sphi 0, %s49
      %s66 = sphi 0, %s50
      %s74 = sphi 0, %s76
      %s77 = sphi 0, %s74
      %s78 = sphi 0, %s77
      %s94 = sphi 0, %s78
      %s102 = sphi 0, %s104
      %s105 = sphi 0, %s102
      %s106 = sphi 0, %s105
      %s122 = sphi 0, %s106
    $region4: #{tpu_custom_call.1} parent=1 // loop_header_branch
      %18 = sbr.rel (%p16) target = $region8
    $region5: #{tpu_custom_call.1} parent=1 // loop_body
      %s20 = ssub.s32 %s15, 1
      %s21 = ssub.s32 %s15, 2
      %s31 = sadd.s32 1, %s24
      %p32 = scmp.ge.s32.totalorder %s31, 1
      %s33 = scalar_select %p32, 0, %s31
      %s34 = sadd.s32 1, %s23
      %s35 = scalar_select %p32, %s34, %s23
      %p36 = scmp.ge.s32.totalorder %s35, 2
      %s37 = scalar_select %p36, 0, %s35
      %s38 = sadd.s32 1, %s22
      %s39 = scalar_select %p36, %s38, %s22
      %p40 = scmp.ge.s32.totalorder %s39, 1
      %s41 = scalar_select %p40, 0, %s39
      %s42 = ssub.s32 %s22, %s41
      %s43 = ssub.s32 %s24, %s33
      %s44 = sor.u32 %s42, %s43
      %p45 = scmp.eq.s32.totalorder %s44, 0
      %s47 = sadd.s32 %s46, 1
      %s48 = scalar_select %p45, %s46, %s47
      %p51 = pneg %p45
      %p52 = scmp.eq.s32.totalorder %s15, 1
      %p53 = por %p51, %p52
      %p54 = scmp.ne.s32.totalorder %s46, %s49
      %p55 = scmp.eq.s32.totalorder %s15, 0
      %p56 = por %p54, %p55
      %p57 = scmp.ne.s32.totalorder %s46, %s49
      %p58 = scmp.eq.s32.totalorder %s20, 1
      %p59 = por %p57, %p58
      %p60 = scmp.ne.s32.totalorder %s49, %s50
      %p61 = scmp.eq.s32.totalorder %s20, 0
      %p62 = por %p60, %p61
      %p63 = scmp.ne.s32.totalorder %s49, %s50
      %p64 = scmp.eq.s32.totalorder %s21, 1
      %p65 = por %p63, %p64
      %p67 = scmp.ne.s32.totalorder %s50, %s66
      %p68 = scmp.eq.s32.totalorder %s21, 0
      %p69 = por %p67, %p68
      %s70 = ssub.s32 %s23, %s37
      %s71 = ssub.s32 %s24, %s33
      %s72 = sor.u32 %s70, %s71
      %p73 = scmp.eq.s32.totalorder %s72, 0
      %s75 = sadd.s32 %s74, 1
      %s76 = scalar_select %p73, %s74, %s75
      %p79 = pneg %p73
      %p80 = scmp.eq.s32.totalorder %s15, 1
      %p81 = por %p79, %p80
      %p82 = scmp.ne.s32.totalorder %s74, %s77
      %p83 = scmp.eq.s32.totalorder %s15, 0
      %p84 = por %p82, %p83
      %p85 = scmp.ne.s32.totalorder %s74, %s77
      %p86 = scmp.eq.s32.totalorder %s20, 1
      %p87 = por %p85, %p86
      %p88 = scmp.ne.s32.totalorder %s77, %s78
      %p89 = scmp.eq.s32.totalorder %s20, 0
      %p90 = por %p88, %p89
      %p91 = scmp.ne.s32.totalorder %s77, %s78
      %p92 = scmp.eq.s32.totalorder %s21, 1
      %p93 = por %p91, %p92
      %p95 = scmp.ne.s32.totalorder %s78, %s94
      %p96 = scmp.eq.s32.totalorder %s21, 0
      %p97 = por %p95, %p96
      %s98 = ssub.s32 %s22, %s41
      %s99 = ssub.s32 %s23, %s37
      %s100 = sor.u32 %s98, %s99
      %p101 = scmp.eq.s32.totalorder %s100, 0
      %s103 = sadd.s32 %s102, 1
      %s104 = scalar_select %p101, %s102, %s103
      %p107 = pneg %p101
      %p108 = scmp.eq.s32.totalorder %s15, 1
      %p109 = por %p107, %p108
      %p110 = scmp.ne.s32.totalorder %s102, %s105
      %p111 = scmp.eq.s32.totalorder %s15, 0
      %p112 = por %p110, %p111
      %p113 = scmp.ne.s32.totalorder %s102, %s105
      %p114 = scmp.eq.s32.totalorder %s20, 1
      %p115 = por %p113, %p114
      %p116 = scmp.ne.s32.totalorder %s105, %s106
      %p117 = scmp.eq.s32.totalorder %s20, 0
      %p118 = por %p116, %p117
      %p119 = scmp.ne.s32.totalorder %s105, %s106
      %p120 = scmp.eq.s32.totalorder %s21, 1
      %p121 = por %p119, %p120
      %p123 = scmp.ne.s32.totalorder %s106, %s122
      %p124 = scmp.eq.s32.totalorder %s21, 0
      %p125 = por %p123, %p124
      %p126 = scmp.le.s32.totalorder 1, %s15
      %p127 = scmp.lt.s32.totalorder %s15, 3
      %p128 = pnand %p126, %p127
      %p129 = pneg %p128
      // Predicated region
      $region9: #{tpu_custom_call.1} parent=5 // pred_check
        _
      $region10: #{tpu_custom_call.1} parent=5 // pred_check_branch
        %131 = sbr.rel (%p128) target = $region12
      $region11: #{tpu_custom_call.1} parent=5 // pred_region
        %s132 = ssub.s32 %s15, 1
        // Predicated region
        $region13: #{tpu_custom_call.1} parent=11 // pred_check
          %p133 = pneg %p62
        $region14: #{tpu_custom_call.1} parent=11 // pred_check_branch
          %135 = sbr.rel (%p133) target = $region16
        $region15: #{tpu_custom_call.1} parent=11 // pred_region
          %s136 = smul.u32 2, %s25
          %s137 = smul.u32 2, %s27
          %139 = vsyncadd [#allocation4], 0
          %s140 = smul.addr %s136, 2
          %s141 = sadd.s32 %s137, %s140
          %s142 = smul.addr %s141, 8
          %s143 = scalar_lea.hbm %s0, %s142
          %s144 = sshll.u32 %s143, 4
          %s145 = int_to_ptr.hbm [resolvable:$true] %s144
          %s146 = sshll.u32 [#allocation3], 4
          %s147 = int_to_ptr.vmem [resolvable:$true] %s146
          %152 = dma.hbm_to_vmem [thread:$0]  %s145, 512, %s147, [#allocation4], 256, 256, 16
        $region16: #{tpu_custom_call.1} parent=11 // pred_fallthru
          _
      $region12: #{tpu_custom_call.1} parent=5 // pred_fallthru
        _
      %p153 = scmp.lt.s32.totalorder %s15, 2
      // Predicated region
      $region17: #{tpu_custom_call.1} parent=5 // pred_check
        %p154 = pneg %p153
      $region18: #{tpu_custom_call.1} parent=5 // pred_check_branch
        %156 = sbr.rel (%p154) target = $region20
      $region19: #{tpu_custom_call.1} parent=5 // pred_region
        // Predicated region
        $region21: #{tpu_custom_call.1} parent=19 // pred_check
          %p157 = pneg %p84
        $region22: #{tpu_custom_call.1} parent=19 // pred_check_branch
          %159 = sbr.rel (%p157) target = $region24
        $region23: #{tpu_custom_call.1} parent=19 // pred_region
          %s160 = sand.u32 %s74, 1
          %s161 = scalar_lea.sflag [#allocation7], %s160
          %s162 = sand.u32 %s74, 1
          %s163 = smul.addr %s162, 1024
          %s164 = scalar_lea.vmem [#allocation6], %s163
          %s165 = smul.u32 64, %s23
          %s166 = smul.u32 2, %s24
          %168 = vsyncadd %s161, 0
          %s169 = smul.addr %s165, 2
          %s170 = sadd.s32 %s166, %s169
          %s171 = smul.addr %s170, 8
          %s172 = scalar_lea.hbm %s1, %s171
          %s173 = sshll.u32 %s172, 4
          %s174 = int_to_ptr.hbm [resolvable:$true] %s173
          %s175 = sshll.u32 %s164, 4
          %s176 = int_to_ptr.vmem [resolvable:$true] %s175
          %181 = dma.hbm_to_vmem [thread:$0]  %s174, 16384, %s176, %s161, 256, 256, 16
        $region24: #{tpu_custom_call.1} parent=19 // pred_fallthru
          _
      $region20: #{tpu_custom_call.1} parent=5 // pred_fallthru
        _
      %p182 = scmp.le.s32.totalorder 1, %s15
      %p183 = scmp.lt.s32.totalorder %s15, 3
      %p184 = pnand %p182, %p183
      %p185 = pneg %p184
      // Predicated region
      $region25: #{tpu_custom_call.1} parent=5 // pred_check
        _
      $region26: #{tpu_custom_call.1} parent=5 // pred_check_branch
        %187 = sbr.rel (%p184) target = $region28
      $region27: #{tpu_custom_call.1} parent=5 // pred_region
        %s188 = ssub.s32 %s15, 1
        // Predicated region
        $region29: #{tpu_custom_call.1} parent=27 // pred_check
          %p189 = pneg %p62
        $region30: #{tpu_custom_call.1} parent=27 // pred_check_branch
          %191 = sbr.rel (%p189) target = $region32
        $region31: #{tpu_custom_call.1} parent=27 // pred_region
          %193 = dma.done [#allocation4], 512
        $region32: #{tpu_custom_call.1} parent=27 // pred_fallthru
          _
        %s194 = sand.u32 %s77, 1
        %s195 = scalar_lea.sflag [#allocation7], %s194
        %s196 = sand.u32 %s77, 1
        %s197 = smul.addr %s196, 1024
        %s198 = scalar_lea.vmem [#allocation6], %s197
        // Predicated region
        $region33: #{tpu_custom_call.1} parent=27 // pred_check
          %p199 = pneg %p90
        $region34: #{tpu_custom_call.1} parent=27 // pred_check_branch
          %201 = sbr.rel (%p199) target = $region36
        $region35: #{tpu_custom_call.1} parent=27 // pred_region
          %203 = dma.done %s195, 16384
        $region36: #{tpu_custom_call.1} parent=27 // pred_fallthru
          _
        %p204 = pneg %p62
        %p205 = pneg %p59
        %s206 = sand.u32 %s77, 1
        %s207 = scalar_lea.sflag [#allocation7], %s206
        %s208 = sand.u32 %s77, 1
        %s209 = smul.addr %s208, 1024
        %s210 = scalar_lea.vmem [#allocation6], %s209
        %p211 = pneg %p90
        %p212 = pneg %p87
        %p213 = pneg %p118
        %p214 = pneg %p115
        %s215 = sand.u32 %s105, 1
        %s216 = scalar_lea.sflag [#allocation5], %s215
        %s217 = sand.u32 %s105, 1
        %s218 = smul.addr %s217, 64
        %s219 = scalar_lea.vmem [#allocation8], %s218
        %s220 = smul.u32 2, %s25
        %s221 = smul.u32 2, %s27
        %s222 = smul.u32 64, %s26
        %s223 = smul.u32 2, %s27
        %s224 = smul.u32 2, %s25
        %s225 = smul.u32 4, %s26
        %p226 = scmp.eq.s32.totalorder %s27, 0
        // Predicated region
        $region37: #{tpu_custom_call.1} parent=27 // pred_check
          %p227 = pneg %p226
        $region38: #{tpu_custom_call.1} parent=27 // pred_check_branch
          %229 = sbr.rel (%p227) target = $region40
        $region39: #{tpu_custom_call.1} parent=27 // pred_region
          %230 = vst [vmem:[#allocation2] sm:$0xff] 0.0
          %231 = vst [vmem:[#allocation2 + $0x8] sm:$0xff] 0.0
          %232 = vst [vmem:[#allocation2 + $0x10] sm:$0xff] 0.0
          %233 = vst [vmem:[#allocation2 + $0x18] sm:$0xff] 0.0
          %234 = vst [vmem:[#allocation2 + $0x20] sm:$0xff] 0.0
          %235 = vst [vmem:[#allocation2 + $0x28] sm:$0xff] 0.0
          %236 = vst [vmem:[#allocation2 + $0x30] sm:$0xff] 0.0
          %237 = vst [vmem:[#allocation2 + $0x38] sm:$0xff] 0.0
        $region40: #{tpu_custom_call.1} parent=27 // pred_fallthru
          _
        %v238 = vld [vmem:[#allocation2] sm:$0xff]
        %v239 = vld [vmem:[#allocation2 + $0x8] sm:$0xff]
        %v240 = vld [vmem:[#allocation2 + $0x10] sm:$0xff]
        %v241 = vld [vmem:[#allocation2 + $0x18] sm:$0xff]
        %v242 = vld [vmem:[#allocation2 + $0x20] sm:$0xff]
        %v243 = vld [vmem:[#allocation2 + $0x28] sm:$0xff]
        %v244 = vld [vmem:[#allocation2 + $0x30] sm:$0xff]
        %v245 = vld [vmem:[#allocation2 + $0x38] sm:$0xff]
        %v246 = vld [vmem:[#allocation3] sm:$0xff]
        %v247 = vld [vmem:[#allocation3 + $0x8] sm:$0xff]
        %v248 = vld [vmem:[#allocation3 + $0x10] sm:$0xff]
        %v249 = vld [vmem:[#allocation3 + $0x18] sm:$0xff]
        %v250 = vld [vmem:[%s198] sm:$0xff]
        %v251 = vld [vmem:[%s198 + $0x8] sm:$0xff]
        %v252 = vld [vmem:[%s198 + $0x10] sm:$0xff]
        %v253 = vld [vmem:[%s198 + $0x18] sm:$0xff]
        %v254 = vld [vmem:[%s198 + $0x20] sm:$0xff]
        %v255 = vld [vmem:[%s198 + $0x28] sm:$0xff]
        %v256 = vld [vmem:[%s198 + $0x30] sm:$0xff]
        %v257 = vld [vmem:[%s198 + $0x38] sm:$0xff]
        %v258 = vld [vmem:[%s198 + $0x40] sm:$0xff]
        %v259 = vld [vmem:[%s198 + $0x48] sm:$0xff]
        %v260 = vld [vmem:[%s198 + $0x50] sm:$0xff]
        %v261 = vld [vmem:[%s198 + $0x58] sm:$0xff]
        %v262 = vld [vmem:[%s198 + $0x60] sm:$0xff]
        %v263 = vld [vmem:[%s198 + $0x68] sm:$0xff]
        %v264 = vld [vmem:[%s198 + $0x70] sm:$0xff]
        %v265 = vld [vmem:[%s198 + $0x78] sm:$0xff]
        %v266 = vld [vmem:[%s198 + $0x80] sm:$0xff]
        %v267 = vld [vmem:[%s198 + $0x88] sm:$0xff]
        %v268 = vld [vmem:[%s198 + $0x90] sm:$0xff]
        %v269 = vld [vmem:[%s198 + $0x98] sm:$0xff]
        %v270 = vld [vmem:[%s198 + $0xa0] sm:$0xff]
        %v271 = vld [vmem:[%s198 + $0xa8] sm:$0xff]
        %v272 = vld [vmem:[%s198 + $0xb0] sm:$0xff]
        %v273 = vld [vmem:[%s198 + $0xb8] sm:$0xff]
        %v274 = vld [vmem:[%s198 + $0xc0] sm:$0xff]
        %v275 = vld [vmem:[%s198 + $0xc8] sm:$0xff]
        %v276 = vld [vmem:[%s198 + $0xd0] sm:$0xff]
        %v277 = vld [vmem:[%s198 + $0xd8] sm:$0xff]
        %v278 = vld [vmem:[%s198 + $0xe0] sm:$0xff]
        %v279 = vld [vmem:[%s198 + $0xe8] sm:$0xff]
        %v280 = vld [vmem:[%s198 + $0xf0] sm:$0xff]
        %v281 = vld [vmem:[%s198 + $0xf8] sm:$0xff]
        %v282 = vld [vmem:[%s198 + $0x100] sm:$0xff]
        %v283 = vld [vmem:[%s198 + $0x108] sm:$0xff]
        %v284 = vld [vmem:[%s198 + $0x110] sm:$0xff]
        %v285 = vld [vmem:[%s198 + $0x118] sm:$0xff]
        %v286 = vld [vmem:[%s198 + $0x120] sm:$0xff]
        %v287 = vld [vmem:[%s198 + $0x128] sm:$0xff]
        %v288 = vld [vmem:[%s198 + $0x130] sm:$0xff]
        %v289 = vld [vmem:[%s198 + $0x138] sm:$0xff]
        %v290 = vld [vmem:[%s198 + $0x140] sm:$0xff]
        %v291 = vld [vmem:[%s198 + $0x148] sm:$0xff]
        %v292 = vld [vmem:[%s198 + $0x150] sm:$0xff]
        %v293 = vld [vmem:[%s198 + $0x158] sm:$0xff]
        %v294 = vld [vmem:[%s198 + $0x160] sm:$0xff]
        %v295 = vld [vmem:[%s198 + $0x168] sm:$0xff]
        %v296 = vld [vmem:[%s198 + $0x170] sm:$0xff]
        %v297 = vld [vmem:[%s198 + $0x178] sm:$0xff]
        %v298 = vld [vmem:[%s198 + $0x180] sm:$0xff]
        %v299 = vld [vmem:[%s198 + $0x188] sm:$0xff]
        %v300 = vld [vmem:[%s198 + $0x190] sm:$0xff]
        %v301 = vld [vmem:[%s198 + $0x198] sm:$0xff]
        %v302 = vld [vmem:[%s198 + $0x1a0] sm:$0xff]
        %v303 = vld [vmem:[%s198 + $0x1a8] sm:$0xff]
        %v304 = vld [vmem:[%s198 + $0x1b0] sm:$0xff]
        %v305 = vld [vmem:[%s198 + $0x1b8] sm:$0xff]
        %v306 = vld [vmem:[%s198 + $0x1c0] sm:$0xff]
        %v307 = vld [vmem:[%s198 + $0x1c8] sm:$0xff]
        %v308 = vld [vmem:[%s198 + $0x1d0] sm:$0xff]
        %v309 = vld [vmem:[%s198 + $0x1d8] sm:$0xff]
        %v310 = vld [vmem:[%s198 + $0x1e0] sm:$0xff]
        %v311 = vld [vmem:[%s198 + $0x1e8] sm:$0xff]
        %v312 = vld [vmem:[%s198 + $0x1f0] sm:$0xff]
        %v313 = vld [vmem:[%s198 + $0x1f8] sm:$0xff]
        %v314 = vld [vmem:[%s198 + $0x200] sm:$0xff]
        %v315 = vld [vmem:[%s198 + $0x208] sm:$0xff]
        %v316 = vld [vmem:[%s198 + $0x210] sm:$0xff]
        %v317 = vld [vmem:[%s198 + $0x218] sm:$0xff]
        %v318 = vld [vmem:[%s198 + $0x220] sm:$0xff]
        %v319 = vld [vmem:[%s198 + $0x228] sm:$0xff]
        %v320 = vld [vmem:[%s198 + $0x230] sm:$0xff]
        %v321 = vld [vmem:[%s198 + $0x238] sm:$0xff]
        %v322 = vld [vmem:[%s198 + $0x240] sm:$0xff]
        %v323 = vld [vmem:[%s198 + $0x248] sm:$0xff]
        %v324 = vld [vmem:[%s198 + $0x250] sm:$0xff]
        %v325 = vld [vmem:[%s198 + $0x258] sm:$0xff]
        %v326 = vld [vmem:[%s198 + $0x260] sm:$0xff]
        %v327 = vld [vmem:[%s198 + $0x268] sm:$0xff]
        %v328 = vld [vmem:[%s198 + $0x270] sm:$0xff]
        %v329 = vld [vmem:[%s198 + $0x278] sm:$0xff]
        %v330 = vld [vmem:[%s198 + $0x280] sm:$0xff]
        %v331 = vld [vmem:[%s198 + $0x288] sm:$0xff]
        %v332 = vld [vmem:[%s198 + $0x290] sm:$0xff]
        %v333 = vld [vmem:[%s198 + $0x298] sm:$0xff]
        %v334 = vld [vmem:[%s198 + $0x2a0] sm:$0xff]
        %v335 = vld [vmem:[%s198 + $0x2a8] sm:$0xff]
        %v336 = vld [vmem:[%s198 + $0x2b0] sm:$0xff]
        %v337 = vld [vmem:[%s198 + $0x2b8] sm:$0xff]
        %v338 = vld [vmem:[%s198 + $0x2c0] sm:$0xff]
        %v339 = vld [vmem:[%s198 + $0x2c8] sm:$0xff]
        %v340 = vld [vmem:[%s198 + $0x2d0] sm:$0xff]
        %v341 = vld [vmem:[%s198 + $0x2d8] sm:$0xff]
        %v342 = vld [vmem:[%s198 + $0x2e0] sm:$0xff]
        %v343 = vld [vmem:[%s198 + $0x2e8] sm:$0xff]
        %v344 = vld [vmem:[%s198 + $0x2f0] sm:$0xff]
        %v345 = vld [vmem:[%s198 + $0x2f8] sm:$0xff]
        %v346 = vld [vmem:[%s198 + $0x300] sm:$0xff]
        %v347 = vld [vmem:[%s198 + $0x308] sm:$0xff]
        %v348 = vld [vmem:[%s198 + $0x310] sm:$0xff]
        %v349 = vld [vmem:[%s198 + $0x318] sm:$0xff]
        %v350 = vld [vmem:[%s198 + $0x320] sm:$0xff]
        %v351 = vld [vmem:[%s198 + $0x328] sm:$0xff]
        %v352 = vld [vmem:[%s198 + $0x330] sm:$0xff]
        %v353 = vld [vmem:[%s198 + $0x338] sm:$0xff]
        %v354 = vld [vmem:[%s198 + $0x340] sm:$0xff]
        %v355 = vld [vmem:[%s198 + $0x348] sm:$0xff]
        %v356 = vld [vmem:[%s198 + $0x350] sm:$0xff]
        %v357 = vld [vmem:[%s198 + $0x358] sm:$0xff]
        %v358 = vld [vmem:[%s198 + $0x360] sm:$0xff]
        %v359 = vld [vmem:[%s198 + $0x368] sm:$0xff]
        %v360 = vld [vmem:[%s198 + $0x370] sm:$0xff]
        %v361 = vld [vmem:[%s198 + $0x378] sm:$0xff]
        %v362 = vld [vmem:[%s198 + $0x380] sm:$0xff]
        %v363 = vld [vmem:[%s198 + $0x388] sm:$0xff]
        %v364 = vld [vmem:[%s198 + $0x390] sm:$0xff]
        %v365 = vld [vmem:[%s198 + $0x398] sm:$0xff]
        %v366 = vld [vmem:[%s198 + $0x3a0] sm:$0xff]
        %v367 = vld [vmem:[%s198 + $0x3a8] sm:$0xff]
        %v368 = vld [vmem:[%s198 + $0x3b0] sm:$0xff]
        %v369 = vld [vmem:[%s198 + $0x3b8] sm:$0xff]
        %v370 = vld [vmem:[%s198 + $0x3c0] sm:$0xff]
        %v371 = vld [vmem:[%s198 + $0x3c8] sm:$0xff]
        %v372 = vld [vmem:[%s198 + $0x3d0] sm:$0xff]
        %v373 = vld [vmem:[%s198 + $0x3d8] sm:$0xff]
        %v374 = vld [vmem:[%s198 + $0x3e0] sm:$0xff]
        %v375 = vld [vmem:[%s198 + $0x3e8] sm:$0xff]
        %v376 = vld [vmem:[%s198 + $0x3f0] sm:$0xff]
        %v377 = vld [vmem:[%s198 + $0x3f8] sm:$0xff]
        %378 = vmatpush.xpose.msra.mxu0 %v280
        %379 = vmatpush.xpose.msra.mxu0 %v278
        %380 = vmatpush.xpose.msra.mxu0 %v276
        %381 = vmatpush.xpose.msra.mxu0 %v274
        %382 = vmatpush.xpose.msra.mxu0 %v272
        %383 = vmatpush.xpose.msra.mxu0 %v270
        %384 = vmatpush.xpose.msra.mxu0 %v268
        %385 = vmatpush.xpose.msra.mxu0 %v266
        %386 = vmatpush.xpose.msra.mxu0 %v264
        %387 = vmatpush.xpose.msra.mxu0 %v262
        %388 = vmatpush.xpose.msra.mxu0 %v260
        %389 = vmatpush.xpose.msra.mxu0 %v258
        %390 = vmatpush.xpose.msra.mxu0 %v256
        %391 = vmatpush.xpose.msra.mxu0 %v254
        %392 = vmatpush.xpose.msra.mxu0 %v252
        %393 = vmatpush.xpose.msra.mxu0 %v250
        %394 = vmatmul.f32.gmra.mxu0 %v246
        %v395 = vpop.f32.mrf.mxu0
        %v396 = vadd.f32 0.0, %v395
        %397 = vmatmul.f32.gmra.mxu0 %v248
        %v398 = vpop.f32.mrf.mxu0
        %v399 = vadd.f32 0.0, %v398
        %400 = vdwg.mxu0
        %401 = vmatpush.xpose.msra.mxu0 %v281
        %402 = vmatpush.xpose.msra.mxu0 %v279
        %403 = vmatpush.xpose.msra.mxu0 %v277
        %404 = vmatpush.xpose.msra.mxu0 %v275
        %405 = vmatpush.xpose.msra.mxu0 %v273
        %406 = vmatpush.xpose.msra.mxu0 %v271
        %407 = vmatpush.xpose.msra.mxu0 %v269
        %408 = vmatpush.xpose.msra.mxu0 %v267
        %409 = vmatpush.xpose.msra.mxu0 %v265
        %410 = vmatpush.xpose.msra.mxu0 %v263
        %411 = vmatpush.xpose.msra.mxu0 %v261
        %412 = vmatpush.xpose.msra.mxu0 %v259
        %413 = vmatpush.xpose.msra.mxu0 %v257
        %414 = vmatpush.xpose.msra.mxu0 %v255
        %415 = vmatpush.xpose.msra.mxu0 %v253
        %416 = vmatpush.xpose.msra.mxu0 %v251
        %417 = vmatmul.f32.gmra.mxu0 %v247
        %v418 = vpop.f32.mrf.mxu0
        %v419 = vadd.f32 %v396, %v418
        %420 = vmatmul.f32.gmra.mxu0 %v249
        %v421 = vpop.f32.mrf.mxu0
        %v422 = vadd.f32 %v399, %v421
        %423 = vdwg.mxu0
        %424 = vmatpush.xpose.msra.mxu0 %v312
        %425 = vmatpush.xpose.msra.mxu0 %v310
        %426 = vmatpush.xpose.msra.mxu0 %v308
        %427 = vmatpush.xpose.msra.mxu0 %v306
        %428 = vmatpush.xpose.msra.mxu0 %v304
        %429 = vmatpush.xpose.msra.mxu0 %v302
        %430 = vmatpush.xpose.msra.mxu0 %v300
        %431 = vmatpush.xpose.msra.mxu0 %v298
        %432 = vmatpush.xpose.msra.mxu0 %v296
        %433 = vmatpush.xpose.msra.mxu0 %v294
        %434 = vmatpush.xpose.msra.mxu0 %v292
        %435 = vmatpush.xpose.msra.mxu0 %v290
        %436 = vmatpush.xpose.msra.mxu0 %v288
        %437 = vmatpush.xpose.msra.mxu0 %v286
        %438 = vmatpush.xpose.msra.mxu0 %v284
        %439 = vmatpush.xpose.msra.mxu0 %v282
        %440 = vmatmul.f32.gmra.mxu0 %v246
        %v441 = vpop.f32.mrf.mxu0
        %v442 = vadd.f32 0.0, %v441
        %443 = vmatmul.f32.gmra.mxu0 %v248
        %v444 = vpop.f32.mrf.mxu0
        %v445 = vadd.f32 0.0, %v444
        %446 = vdwg.mxu0
        %447 = vmatpush.xpose.msra.mxu0 %v313
        %448 = vmatpush.xpose.msra.mxu0 %v311
        %449 = vmatpush.xpose.msra.mxu0 %v309
        %450 = vmatpush.xpose.msra.mxu0 %v307
        %451 = vmatpush.xpose.msra.mxu0 %v305
        %452 = vmatpush.xpose.msra.mxu0 %v303
        %453 = vmatpush.xpose.msra.mxu0 %v301
        %454 = vmatpush.xpose.msra.mxu0 %v299
        %455 = vmatpush.xpose.msra.mxu0 %v297
        %456 = vmatpush.xpose.msra.mxu0 %v295
        %457 = vmatpush.xpose.msra.mxu0 %v293
        %458 = vmatpush.xpose.msra.mxu0 %v291
        %459 = vmatpush.xpose.msra.mxu0 %v289
        %460 = vmatpush.xpose.msra.mxu0 %v287
        %461 = vmatpush.xpose.msra.mxu0 %v285
        %462 = vmatpush.xpose.msra.mxu0 %v283
        %463 = vmatmul.f32.gmra.mxu0 %v247
        %v464 = vpop.f32.mrf.mxu0
        %v465 = vadd.f32 %v442, %v464
        %466 = vmatmul.f32.gmra.mxu0 %v249
        %v467 = vpop.f32.mrf.mxu0
        %v468 = vadd.f32 %v445, %v467
        %469 = vdwg.mxu0
        %470 = vmatpush.xpose.msra.mxu0 %v344
        %471 = vmatpush.xpose.msra.mxu0 %v342
        %472 = vmatpush.xpose.msra.mxu0 %v340
        %473 = vmatpush.xpose.msra.mxu0 %v338
        %474 = vmatpush.xpose.msra.mxu0 %v336
        %475 = vmatpush.xpose.msra.mxu0 %v334
        %476 = vmatpush.xpose.msra.mxu0 %v332
        %477 = vmatpush.xpose.msra.mxu0 %v330
        %478 = vmatpush.xpose.msra.mxu0 %v328
        %479 = vmatpush.xpose.msra.mxu0 %v326
        %480 = vmatpush.xpose.msra.mxu0 %v324
        %481 = vmatpush.xpose.msra.mxu0 %v322
        %482 = vmatpush.xpose.msra.mxu0 %v320
        %483 = vmatpush.xpose.msra.mxu0 %v318
        %484 = vmatpush.xpose.msra.mxu0 %v316
        %485 = vmatpush.xpose.msra.mxu0 %v314
        %486 = vmatmul.f32.gmra.mxu0 %v246
        %v487 = vpop.f32.mrf.mxu0
        %v488 = vadd.f32 0.0, %v487
        %489 = vmatmul.f32.gmra.mxu0 %v248
        %v490 = vpop.f32.mrf.mxu0
        %v491 = vadd.f32 0.0, %v490
        %492 = vdwg.mxu0
        %493 = vmatpush.xpose.msra.mxu0 %v345
        %494 = vmatpush.xpose.msra.mxu0 %v343
        %495 = vmatpush.xpose.msra.mxu0 %v341
        %496 = vmatpush.xpose.msra.mxu0 %v339
        %497 = vmatpush.xpose.msra.mxu0 %v337
        %498 = vmatpush.xpose.msra.mxu0 %v335
        %499 = vmatpush.xpose.msra.mxu0 %v333
        %500 = vmatpush.xpose.msra.mxu0 %v331
        %501 = vmatpush.xpose.msra.mxu0 %v329
        %502 = vmatpush.xpose.msra.mxu0 %v327
        %503 = vmatpush.xpose.msra.mxu0 %v325
        %504 = vmatpush.xpose.msra.mxu0 %v323
        %505 = vmatpush.xpose.msra.mxu0 %v321
        %506 = vmatpush.xpose.msra.mxu0 %v319
        %507 = vmatpush.xpose.msra.mxu0 %v317
        %508 = vmatpush.xpose.msra.mxu0 %v315
        %509 = vmatmul.f32.gmra.mxu0 %v247
        %v510 = vpop.f32.mrf.mxu0
        %v511 = vadd.f32 %v488, %v510
        %512 = vmatmul.f32.gmra.mxu0 %v249
        %v513 = vpop.f32.mrf.mxu0
        %v514 = vadd.f32 %v491, %v513
        %515 = vdwg.mxu0
        %516 = vmatpush.xpose.msra.mxu0 %v376
        %517 = vmatpush.xpose.msra.mxu0 %v374
        %518 = vmatpush.xpose.msra.mxu0 %v372
        %519 = vmatpush.xpose.msra.mxu0 %v370
        %520 = vmatpush.xpose.msra.mxu0 %v368
        %521 = vmatpush.xpose.msra.mxu0 %v366
        %522 = vmatpush.xpose.msra.mxu0 %v364
        %523 = vmatpush.xpose.msra.mxu0 %v362
        %524 = vmatpush.xpose.msra.mxu0 %v360
        %525 = vmatpush.xpose.msra.mxu0 %v358
        %526 = vmatpush.xpose.msra.mxu0 %v356
        %527 = vmatpush.xpose.msra.mxu0 %v354
        %528 = vmatpush.xpose.msra.mxu0 %v352
        %529 = vmatpush.xpose.msra.mxu0 %v350
        %530 = vmatpush.xpose.msra.mxu0 %v348
        %531 = vmatpush.xpose.msra.mxu0 %v346
        %532 = vmatmul.f32.gmra.mxu0 %v246
        %v533 = vpop.f32.mrf.mxu0
        %v534 = vadd.f32 0.0, %v533
        %535 = vmatmul.f32.gmra.mxu0 %v248
        %v536 = vpop.f32.mrf.mxu0
        %v537 = vadd.f32 0.0, %v536
        %538 = vdwg.mxu0
        %539 = vmatpush.xpose.msra.mxu0 %v377
        %540 = vmatpush.xpose.msra.mxu0 %v375
        %541 = vmatpush.xpose.msra.mxu0 %v373
        %542 = vmatpush.xpose.msra.mxu0 %v371
        %543 = vmatpush.xpose.msra.mxu0 %v369
        %544 = vmatpush.xpose.msra.mxu0 %v367
        %545 = vmatpush.xpose.msra.mxu0 %v365
        %546 = vmatpush.xpose.msra.mxu0 %v363
        %547 = vmatpush.xpose.msra.mxu0 %v361
        %548 = vmatpush.xpose.msra.mxu0 %v359
        %549 = vmatpush.xpose.msra.mxu0 %v357
        %550 = vmatpush.xpose.msra.mxu0 %v355
        %551 = vmatpush.xpose.msra.mxu0 %v353
        %552 = vmatpush.xpose.msra.mxu0 %v351
        %553 = vmatpush.xpose.msra.mxu0 %v349
        %554 = vmatpush.xpose.msra.mxu0 %v347
        %555 = vmatmul.f32.gmra.mxu0 %v247
        %v556 = vpop.f32.mrf.mxu0
        %v557 = vadd.f32 %v534, %v556
        %558 = vmatmul.f32.gmra.mxu0 %v249
        %v559 = vpop.f32.mrf.mxu0
        %v560 = vadd.f32 %v537, %v559
        %561 = vdwg.mxu0
        %v562 = vadd.f32 %v238, %v419
        %v563 = vadd.f32 %v239, %v465
        %v564 = vadd.f32 %v240, %v511
        %v565 = vadd.f32 %v241, %v557
        %v566 = vadd.f32 %v242, %v422
        %v567 = vadd.f32 %v243, %v468
        %v568 = vadd.f32 %v244, %v514
        %v569 = vadd.f32 %v245, %v560
        %570 = vst [vmem:[#allocation2] sm:$0xff] %v562
        %571 = vst [vmem:[#allocation2 + $0x8] sm:$0xff] %v563
        %572 = vst [vmem:[#allocation2 + $0x10] sm:$0xff] %v564
        %573 = vst [vmem:[#allocation2 + $0x18] sm:$0xff] %v565
        %574 = vst [vmem:[#allocation2 + $0x20] sm:$0xff] %v566
        %575 = vst [vmem:[#allocation2 + $0x28] sm:$0xff] %v567
        %576 = vst [vmem:[#allocation2 + $0x30] sm:$0xff] %v568
        %577 = vst [vmem:[#allocation2 + $0x38] sm:$0xff] %v569
        // Predicated region
        $region41: #{tpu_custom_call.1} parent=27 // pred_check
          %p578 = pneg %p226
        $region42: #{tpu_custom_call.1} parent=27 // pred_check_branch
          %580 = sbr.rel (%p578) target = $region44
        $region43: #{tpu_custom_call.1} parent=27 // pred_region
          %v581 = vld [vmem:[#allocation2] sm:$0xff]
          %v582 = vld [vmem:[#allocation2 + $0x8] sm:$0xff]
          %v583 = vld [vmem:[#allocation2 + $0x10] sm:$0xff]
          %v584 = vld [vmem:[#allocation2 + $0x18] sm:$0xff]
          %v585 = vld [vmem:[#allocation2 + $0x20] sm:$0xff]
          %v586 = vld [vmem:[#allocation2 + $0x28] sm:$0xff]
          %v587 = vld [vmem:[#allocation2 + $0x30] sm:$0xff]
          %v588 = vld [vmem:[#allocation2 + $0x38] sm:$0xff]
          %589 = vst [vmem:[%s219] sm:$0xff] %v581
          %590 = vst [vmem:[%s219 + $0x8] sm:$0xff] %v582
          %591 = vst [vmem:[%s219 + $0x10] sm:$0xff] %v583
          %592 = vst [vmem:[%s219 + $0x18] sm:$0xff] %v584
          %593 = vst [vmem:[%s219 + $0x20] sm:$0xff] %v585
          %594 = vst [vmem:[%s219 + $0x28] sm:$0xff] %v586
          %595 = vst [vmem:[%s219 + $0x30] sm:$0xff] %v587
          %596 = vst [vmem:[%s219 + $0x38] sm:$0xff] %v588
        $region44: #{tpu_custom_call.1} parent=27 // pred_fallthru
          _
        %s597 = sand.u32 %s105, 1
        %s598 = scalar_lea.sflag [#allocation5], %s597
        %s599 = sand.u32 %s105, 1
        %s600 = smul.addr %s599, 64
        %s601 = scalar_lea.vmem [#allocation8], %s600
        // Predicated region
        $region45: #{tpu_custom_call.1} parent=27 // pred_check
          %p602 = pneg %p115
        $region46: #{tpu_custom_call.1} parent=27 // pred_check_branch
          %604 = sbr.rel (%p602) target = $region48
        $region47: #{tpu_custom_call.1} parent=27 // pred_region
          %s605 = smul.u32 2, %s25
          %s606 = smul.u32 4, %s26
          %608 = vsyncadd %s598, 0
          %s609 = smul.addr %s605, 8
          %s610 = sadd.s32 %s606, %s609
          %s611 = smul.addr %s610, 8
          %s612 = scalar_lea.hbm %s2, %s611
          %s613 = sshll.u32 %s601, 4
          %s614 = int_to_ptr.vmem [resolvable:$true] %s613
          %s615 = sshll.u32 %s612, 4
          %s616 = int_to_ptr.hbm [resolvable:$true] %s615
          %621 = dma.vmem_to_hbm [thread:$0]  %s614, 1024, %s616, %s598, 512, 1024, 32
        $region48: #{tpu_custom_call.1} parent=27 // pred_fallthru
          _
      $region28: #{tpu_custom_call.1} parent=5 // pred_fallthru
        _
      %p622 = scmp.le.s32.totalorder 2, %s15
      // Predicated region
      $region49: #{tpu_custom_call.1} parent=5 // pred_check
        %p623 = pneg %p622
      $region50: #{tpu_custom_call.1} parent=5 // pred_check_branch
        %625 = sbr.rel (%p623) target = $region52
      $region51: #{tpu_custom_call.1} parent=5 // pred_region
        %s626 = ssub.s32 %s15, 2
        // Predicated region
        $region53: #{tpu_custom_call.1} parent=51 // pred_check
          %p627 = pneg %p121
        $region54: #{tpu_custom_call.1} parent=51 // pred_check_branch
          %629 = sbr.rel (%p627) target = $region56
        $region55: #{tpu_custom_call.1} parent=51 // pred_region
          %s630 = sand.u32 %s106, 1
          %s631 = scalar_lea.sflag [#allocation5], %s630
          %s632 = sand.u32 %s106, 1
          %s633 = smul.addr %s632, 64
          %s634 = scalar_lea.vmem [#allocation8], %s633
          %636 = dma.done %s631, 1024
        $region56: #{tpu_custom_call.1} parent=51 // pred_fallthru
          _
      $region52: #{tpu_custom_call.1} parent=5 // pred_fallthru
        _
    $region6: #{tpu_custom_call.1} parent=1 // loop_footer
      %s19 = sadd.s32 1, %s15
    $region7: #{tpu_custom_call.1} parent=1 // loop_footer_branch
      %14 = sbr.rel target = $region3
    $region8: #{tpu_custom_call.1} parent=1 // loop_exit
      _
    %637 = vsyncpa [#allocation4], 1
    %s638 = scalar_lea.sflag [#allocation4], 1
    %639 = vsyncpa %s638, 1
    %640 = vsyncpa [#allocation7], 1
    %s641 = scalar_lea.sflag [#allocation7], 1
    %642 = vsyncpa %s641, 1
    %643 = vsyncpa [#allocation5], 1
    %s644 = scalar_lea.sflag [#allocation5], 1
    %645 = vsyncpa %s644, 1

</llo_original>
